<compile_context>
chip_gen: v7x
topology: tpu7x:2x2x1
jax: 0.10.0
libtpu: 0.0.40
codegen_flags: <defaults>
</compile_context>

<pallas_src>
import jax
import jax.numpy as jnp
from jax.experimental import pallas as pl
from jax.experimental.pallas import tpu as pltpu


def _attn_pool_kernel(x_ref, mask_ref, w_ref, b_ref, out_ref):
    # x_ref:    (TB, S, D) VMEM, input dtype (f32 or bf16)
    # mask_ref: (TB, S)    VMEM, float32 (1.0 = keep, 0.0 = masked)
    # w_ref:    (D, 1)     VMEM, resident across grid steps (constant index_map)
    # b_ref:    (1,)       SMEM, float32 scalar
    # out_ref:  (TB, D)    VMEM
    x = x_ref[...]                                   # keep input dtype for MXU
    tb, s, d = x.shape
    w = w_ref[...].astype(x.dtype)                   # (D, 1)
    b = b_ref[0]                                     # f32 scalar

    # --- score projection on the MXU: (TB*S, D) @ (D, 1) -> (TB*S, 1) ---
    scores = jnp.dot(x.reshape(tb * s, d), w,
                     preferred_element_type=jnp.float32)
    scores = scores.reshape(tb, s) + b               # (TB, S)

    # --- masked_fill(~mask, -inf) ---
    keep = mask_ref[...] > 0.0
    scores = jnp.where(keep, scores, -jnp.inf)

    # --- softmax over the sequence axis (dim=1) ---
    mx = jnp.max(scores, axis=1, keepdims=True)      # (TB, 1)
    e = jnp.exp(scores - mx)                         # (TB, S)
    denom = jnp.sum(e, axis=1, keepdims=True)        # (TB, 1)
    attw = e * pl.reciprocal(denom, approx=True)     # (TB, S), EUP reciprocal

    # --- weighted pooling on the MXU: (TB,1,S) @ (TB,S,D) -> (TB,1,D) ---
    out = jnp.einsum("bqs,bsd->bqd",
                     attw.astype(x.dtype).reshape(tb, 1, s), x,
                     preferred_element_type=jnp.float32)
    out_ref[...] = out[:, 0, :].astype(out_ref.dtype)


def _pick_batch_tile(batch, seq, dim, itemsize):
    """Batch tile such that the double-buffered x stream stays comfortably
    inside the default scoped-VMEM limit (32 MiB), which is the tight case on
    v7x (64 MiB physical VMEM). ~6 MiB per x tile => <= ~12 MiB double-buffered
    plus small mask/out buffers and intermediates."""
    budget_bytes = 6 * 1024 * 1024
    rows = max(1, budget_bytes // max(1, seq * dim * itemsize))
    tb = min(batch, rows)
    if tb >= batch:
        return batch                      # whole batch fits in one block
    tb = max(8, (tb // 8) * 8)            # (TB, S)/(TB, D) blocks need TB % 8 == 0
    while tb > 8 and batch % tb != 0:
        tb -= 8
    if batch % tb != 0:
        return batch                      # fallback: single block over batch
    return tb


def simplified_attention_pooling(x, mask, weight, bias):
    """x: (B, S, D) float, mask: (B, S, 1) bool, weight: (1, D), bias: (1,)."""
    B, S, D = x.shape
    mask_f = mask.reshape(B, S).astype(jnp.float32)        # (B, S)
    w_t = weight.reshape(1, D).T.astype(x.dtype)           # (D, 1), MXU layout
    bias_s = bias.reshape(1).astype(jnp.float32)           # (1,) scalar in SMEM

    tb = _pick_batch_tile(B, S, D, x.dtype.itemsize)
    grid = (B // tb,)

    return pl.pallas_call(
        _attn_pool_kernel,
        out_shape=jax.ShapeDtypeStruct((B, D), x.dtype),
        grid=grid,
        in_specs=[
            pl.BlockSpec((tb, S, D), lambda i: (i, 0, 0)),          # x tile (streamed)
            pl.BlockSpec((tb, S), lambda i: (i, 0)),                # mask tile
            pl.BlockSpec((D, 1), lambda i: (0, 0)),                 # weight (resident)
            pl.BlockSpec(memory_space=pltpu.MemorySpace.SMEM),      # bias scalar
        ],
        out_specs=pl.BlockSpec((tb, D), lambda i: (i, 0)),
        compiler_params=pltpu.CompilerParams(
            dimension_semantics=("parallel",),                      # shard B over TCs
        ),
    )(x, mask_f, w_t, bias_s)


def _reference(x, mask, weight, bias):
    scores = jnp.einsum("bsd,od->bs", x, weight) + bias[0]
    scores = jnp.where(mask.squeeze(-1), scores, -jnp.inf)
    attw = jax.nn.softmax(scores, axis=1)[..., None]
    return jnp.sum(attw * x, axis=1)


if __name__ == "__main__":
    B, S, D = 2, 8, 32  # batch, sequence length, dim_model

    key = jax.random.PRNGKey(0)
    kx, kw, kb, km = jax.random.split(key, 4)

    x = jax.random.normal(kx, (B, S, D), dtype=jnp.float32)

    # nn.Linear(dim_model, 1): weight (1, D), bias (1,)
    bound = 1.0 / (D ** 0.5)
    weight = jax.random.uniform(kw, (1, D), minval=-bound, maxval=bound,
                                dtype=jnp.float32)
    bias = jax.random.uniform(kb, (1,), minval=-bound, maxval=bound,
                              dtype=jnp.float32)

    # mask: (B, S, 1) bool, guarantee at least one valid position per row
    mask = jax.random.uniform(km, (B, S, 1)) < 0.7
    mask = mask.at[:, 0, :].set(True)

    out = jax.block_until_ready(simplified_attention_pooling(x, mask, weight, bias))
    ref = _reference(x, mask, weight, bias)

    assert out.shape == (B, D)
    # Tolerance accounts for the EUP approximate reciprocal in the softmax
    # normalization (set approx=False in the kernel for tighter parity).
    assert jnp.allclose(out, ref, atol=5e-3, rtol=5e-3), "mismatch vs reference"

    print("KERNEL_OK")
</pallas_src>

<mosaic_0001>
module attributes {stable_mosaic.version = 11 : i64} {
  func.func @_attn_pool_kernel(%arg0: i32, %arg1: memref<2x8x32xf32, #tpu.memory_space<vmem>>, %arg2: memref<2x8xf32, #tpu.memory_space<vmem>>, %arg3: memref<32x1xf32, #tpu.memory_space<vmem>>, %arg4: memref<1xf32, #tpu.memory_space<smem>>, %arg5: memref<2x32xf32, #tpu.memory_space<vmem>>) attributes {dimension_semantics = [#tpu.dimension_semantics<parallel>], iteration_bounds = array<i64: 1>, scalar_prefetch = 0 : i64, scratch_operands = 0 : i64, tpu.core_type = #tpu.core_type<tc>, window_params = [{transform_indices = @transform_0, window_bounds = array<i64: 2, 8, 32>}, {transform_indices = @transform_1, window_bounds = array<i64: 2, 8>}, {pipeline_mode = #tpu.pipeline_mode<synchronous>, transform_indices = @transform_2, window_bounds = array<i64: 32, 1>}, {transform_indices = @transform_3, window_bounds = array<i64: 1>}, {transform_indices = @transform_4, window_bounds = array<i64: 2, 32>}]} {
    %c0 = arith.constant 0 : index
    %c0_0 = arith.constant 0 : index
    %c0_1 = arith.constant 0 : index
    %0 = vector.load %arg1[%c0, %c0_0, %c0_1] : memref<2x8x32xf32, #tpu.memory_space<vmem>>, vector<2x8x32xf32>
    %c0_2 = arith.constant 0 : index
    %c0_3 = arith.constant 0 : index
    %1 = vector.load %arg3[%c0_2, %c0_3] : memref<32x1xf32, #tpu.memory_space<vmem>>, vector<32x1xf32>
    %c0_4 = arith.constant 0 : index
    %2 = memref.load %arg4[%c0_4] : memref<1xf32, #tpu.memory_space<smem>>
    %3 = vector.shape_cast %0 : vector<2x8x32xf32> to vector<16x32xf32>
    %cst = arith.constant dense<0.000000e+00> : vector<16x1xf32>
    %4 = tpu.matmul %3, %1, %cst {dimension_numbers = #tpu.dot_dimension_numbers<[1], [0], [0], [1], [0, 0, 1, 1], [], []>} : vector<16x32xf32>, vector<32x1xf32>, vector<16x1xf32> -> vector<16x1xf32>
    %5 = vector.shape_cast %4 : vector<16x1xf32> to vector<2x8xf32>
    %6 = vector.broadcast %2 : f32 to vector<2x8xf32>
    %7 = arith.addf %5, %6 : vector<2x8xf32>
    %c0_5 = arith.constant 0 : index
    %c0_6 = arith.constant 0 : index
    %8 = vector.load %arg2[%c0_5, %c0_6] : memref<2x8xf32, #tpu.memory_space<vmem>>, vector<2x8xf32>
    %cst_7 = arith.constant 0.000000e+00 : f32
    %9 = vector.broadcast %cst_7 : f32 to vector<2x8xf32>
    %10 = arith.cmpf ogt, %8, %9 : vector<2x8xf32>
    %cst_8 = arith.constant 0xFF800000 : f32
    %11 = vector.broadcast %cst_8 : f32 to vector<2x8xf32>
    %12 = arith.select %10, %7, %11 : vector<2x8xi1>, vector<2x8xf32>
    %cst_9 = arith.constant dense<0xFF800000> : vector<2xf32>
    %13 = vector.multi_reduction <maximumf>, %12, %cst_9 [1] : vector<2x8xf32> to vector<2xf32>
    %14 = vector.shape_cast %13 : vector<2xf32> to vector<2x1xf32>
    %15 = vector.broadcast %14 : vector<2x1xf32> to vector<2x8xf32>
    %16 = arith.subf %12, %15 : vector<2x8xf32>
    %17 = math.exp %16 : vector<2x8xf32>
    %cst_10 = arith.constant dense<0.000000e+00> : vector<2xf32>
    %18 = vector.multi_reduction <add>, %17, %cst_10 [1] : vector<2x8xf32> to vector<2xf32>
    %19 = vector.shape_cast %18 : vector<2xf32> to vector<2x1xf32>
    %20 = tpu.reciprocal %19 {approx = true} : vector<2x1xf32> -> vector<2x1xf32>
    %21 = vector.broadcast %20 : vector<2x1xf32> to vector<2x8xf32>
    %22 = arith.mulf %17, %21 : vector<2x8xf32>
    %23 = vector.shape_cast %22 : vector<2x8xf32> to vector<2x1x8xf32>
    "tpu.trace_start"() <{level = 10 : i32, message = "bqs,bsd->bqd"}> : () -> ()
    %cst_11 = arith.constant dense<0.000000e+00> : vector<2x1x32xf32>
    %24 = tpu.matmul %23, %0, %cst_11 {dimension_numbers = #tpu.dot_dimension_numbers<[2], [1], [1], [2], [0, 0, 0, 1, 1, 2], [0], [0]>} : vector<2x1x8xf32>, vector<2x8x32xf32>, vector<2x1x32xf32> -> vector<2x1x32xf32>
    "tpu.trace_stop"() : () -> ()
    %25 = vector.shape_cast %24 : vector<2x1x32xf32> to vector<2x32xf32>
    %c0_12 = arith.constant 0 : index
    %c0_13 = arith.constant 0 : index
    %26 = vector.load %arg5[%c0_12, %c0_13] : memref<2x32xf32, #tpu.memory_space<vmem>>, vector<2x32xf32>
    tpu.vector_store %arg5[%c0_12, %c0_13], %25 {strides = array<i32>} : memref<2x32xf32, #tpu.memory_space<vmem>>, vector<2x32xf32>,
    return
  }
  func.func @transform_0(%arg0: i32) -> (i32, i32, i32) {
    %c0_i32 = arith.constant 0 : i32
    %c0_i32_0 = arith.constant 0 : i32
    %c0_i32_1 = arith.constant 0 : i32
    return %arg0, %c0_i32, %c0_i32_0 : i32, i32, i32
  }
  func.func @transform_1(%arg0: i32) -> (i32, i32) {
    %c0_i32 = arith.constant 0 : i32
    %c0_i32_0 = arith.constant 0 : i32
    return %arg0, %c0_i32 : i32, i32
  }
  func.func @transform_2(%arg0: i32) -> (i32, i32) {
    %c0_i32 = arith.constant 0 : i32
    %c0_i32_0 = arith.constant 0 : i32
    %c0_i32_1 = arith.constant 0 : i32
    return %c0_i32, %c0_i32_0 : i32, i32
  }
  func.func @transform_3(%arg0: i32) -> i32 {
    %c0_i32 = arith.constant 0 : i32
    %c0_i32_0 = arith.constant 0 : i32
    return %c0_i32 : i32
  }
  func.func @transform_4(%arg0: i32) -> (i32, i32) {
    %c0_i32 = arith.constant 0 : i32
    %c0_i32_0 = arith.constant 0 : i32
    return %arg0, %c0_i32 : i32, i32
  }
}

</mosaic_0001>

<llo_original>
// kernel: tpu_custom_call.1
$region0: #{tpu_custom_call.1}
  #allocation0 [shape = 'u32[]', space=smem, size = 0x4, offset = 0x4, fixed_abs, tag = 'smem constant byte address 0x4 - core index']
  #allocation1 [shape = 'u32[144,128]{1,0:T(1,128)}', space=vmem, size = 0x12000, scoped, tag = 'internal scratch']
  #allocation2 [shape = 'f32[1]{0:T(128)S(6)}', space=smem, size = 0x200, scoped, tag = 'scoped memory for tpu_custom_call.1']
  %s0 = inlined_call_operand.vmem [shape: f32[2,8,32], index: 0, kind: input, shape index: {}]
  %s1 = inlined_call_operand.vmem [shape: f32[2,8], index: 1, kind: input, shape index: {}]
  %s2 = inlined_call_operand.vmem [shape: f32[32,1], index: 2, kind: input, shape index: {}]
  %s3 = inlined_call_operand.<no memory space> [shape: f32[1], index: 3, kind: input, shape index: {}]
  %s4 = inlined_call_operand.hbm [shape: f32[2,32], index: 4, kind: output, shape index: {}]
  %s5 = sld [smem:[#allocation0]]
  $region26: #{tpu_custom_call.1} parent=0
    _
  %s7 = ssub.s32 1, %s5
  %s8 = scalar_select 0, %s7, %s5
  %9 = sst [smem:[#allocation2]] %s3
  $region1: #{tpu_custom_call.1} parent=0
    #allocation3 [shape = 'u8[1024]{0}', space=vmem, size = 0x400, scoped, tag = 'output window, operand 0, single buffered']
    #allocation4 [shape = 's32[1]{0}', space=sflag, size = 0x4, scoped, tag = 'scoped memory for tpu_custom_call.1']
    %10 = vsyncpa [#allocation4], 0
    // Predicated region
    $region2: #{tpu_custom_call.1} parent=1 // pred_check
      _
    $region3: #{tpu_custom_call.1} parent=1 // pred_check_branch
      %12 = sbr.rel (0) target = $region5
    $region4: #{tpu_custom_call.1} parent=1 // pred_region
      _
    $region5: #{tpu_custom_call.1} parent=1 // pred_fallthru
      _
    // Predicated region
    $region6: #{tpu_custom_call.1} parent=1 // pred_check
      _
    $region7: #{tpu_custom_call.1} parent=1 // pred_check_branch
      %14 = sbr.rel (0) target = $region9
    $region8: #{tpu_custom_call.1} parent=1 // pred_region
      _
    $region9: #{tpu_custom_call.1} parent=1 // pred_fallthru
      _
    // Predicated region
    $region10: #{tpu_custom_call.1} parent=1 // pred_check
      _
    $region11: #{tpu_custom_call.1} parent=1 // pred_check_branch
      %16 = sbr.rel (0) target = $region13
    $region12: #{tpu_custom_call.1} parent=1 // pred_region
      _
    $region13: #{tpu_custom_call.1} parent=1 // pred_fallthru
      _
    // Predicated region
    $region14: #{tpu_custom_call.1} parent=1 // pred_check
      _
    $region15: #{tpu_custom_call.1} parent=1 // pred_check_branch
      %18 = sbr.rel (0) target = $region17
    $region16: #{tpu_custom_call.1} parent=1 // pred_region
      _
    $region17: #{tpu_custom_call.1} parent=1 // pred_fallthru
      _
    %v19 = vld [vmem:[%s0] sm:$0xff]
    %v20 = vld [vmem:[%s0 + $0x8] sm:$0xff]
    %v21 = vld [vmem:[%s2] sm:$0xff]
    %v22 = vld [vmem:[%s2 + $0x8] sm:$0xff]
    %v23 = vld [vmem:[%s2 + $0x10] sm:$0xff]
    %v24 = vld [vmem:[%s2 + $0x18] sm:$0xff]
    %s25 = sld [smem:[#allocation2]]
    %vm26 = vcmask 261120
    %v28 = vsel %vm26, %v19, 0
    %v31 = vsel %vm26, %v20, 0
    %33 = vmatprep.subr.mxu0 0.0
    %34 = vmatpush1.msra.mxu0 %v21
    %35 = vmatprep.subr.mxu0 0.0
    %36 = vmatpush1.msra.mxu0 %v22
    %37 = vmatprep.subr.mxu0 0.0
    %38 = vmatpush1.msra.mxu0 %v23
    %39 = vmatprep.subr.mxu0 0.0
    %40 = vmatpush1.msra.mxu0 %v24
    %41 = vmatprep.subr.mxu0 0.0
    %42 = vmatpush1.msra.mxu0 0.0
    %43 = vmatprep.subr.mxu0 0.0
    %44 = vmatpush1.msra.mxu0 0.0
    %45 = vmatprep.subr.mxu0 0.0
    %46 = vmatpush1.msra.mxu0 0.0
    %47 = vmatprep.subr.mxu0 0.0
    %48 = vmatpush1.msra.mxu0 0.0
    %49 = vmatprep.subr.mxu0 0.0
    %50 = vmatpush1.msra.mxu0 0.0
    %51 = vmatprep.subr.mxu0 0.0
    %52 = vmatpush1.msra.mxu0 0.0
    %53 = vmatprep.subr.mxu0 0.0
    %54 = vmatpush1.msra.mxu0 0.0
    %55 = vmatprep.subr.mxu0 0.0
    %56 = vmatpush1.msra.mxu0 0.0
    %57 = vmatprep.subr.mxu0 0.0
    %58 = vmatpush1.msra.mxu0 0.0
    %59 = vmatprep.subr.mxu0 0.0
    %60 = vmatpush1.msra.mxu0 0.0
    %61 = vmatprep.subr.mxu0 0.0
    %62 = vmatpush1.msra.mxu0 0.0
    %63 = vmatprep.subr.mxu0 0.0
    %64 = vmatpush1.msra.mxu0 0.0
    %65 = vmatprep.subr.mxu0 0.0
    %66 = vmatpush1.msra.mxu0 0.0
    %67 = vmatprep.subr.mxu0 0.0
    %68 = vmatpush1.msra.mxu0 0.0
    %69 = vmatprep.subr.mxu0 0.0
    %70 = vmatpush1.msra.mxu0 0.0
    %71 = vmatprep.subr.mxu0 0.0
    %72 = vmatpush1.msra.mxu0 0.0
    %73 = vmatprep.subr.mxu0 0.0
    %74 = vmatpush1.msra.mxu0 0.0
    %75 = vmatprep.subr.mxu0 0.0
    %76 = vmatpush1.msra.mxu0 0.0
    %77 = vmatprep.subr.mxu0 0.0
    %78 = vmatpush1.msra.mxu0 0.0
    %79 = vmatprep.subr.mxu0 0.0
    %80 = vmatpush1.msra.mxu0 0.0
    %81 = vmatprep.subr.mxu0 0.0
    %82 = vmatpush1.msra.mxu0 0.0
    %83 = vmatprep.subr.mxu0 0.0
    %84 = vmatpush1.msra.mxu0 0.0
    %85 = vmatprep.subr.mxu0 0.0
    %86 = vmatpush1.msra.mxu0 0.0
    %87 = vmatprep.subr.mxu0 0.0
    %88 = vmatpush1.msra.mxu0 0.0
    %89 = vmatprep.subr.mxu0 0.0
    %90 = vmatpush1.msra.mxu0 0.0
    %91 = vmatprep.subr.mxu0 0.0
    %92 = vmatpush1.msra.mxu0 0.0
    %93 = vmatprep.subr.mxu0 0.0
    %94 = vmatpush1.msra.mxu0 0.0
    %95 = vmatprep.subr.mxu0 0.0
    %96 = vmatpush1.msra.mxu0 0.0
    %97 = vmatprep.mubr.f32.mxu0 0.0
    %98 = vmatmul.mubr.f32.gmra.mrb[0].mxu0 %v28
    %v99 = vpop.f32.mrb[0].mxu0
    %v100 = vadd.f32 0.0, %v99
    %v101 = vpop.f32.mrb[0].mxu0
    %102 = vmatprep.mubr.f32.mxu0 0.0
    %103 = vmatmul.mubr.f32.gmra.mrb[0].mxu0 %v31
    %v104 = vpop.f32.mrb[0].mxu0
    %v105 = vadd.f32 0.0, %v104
    %v106 = vpop.f32.mrb[0].mxu0
    %107 = vdwg.mxu0
    %v108 = vstv %s25
    %v109 = vadd.f32 %v100, %v108
    %v110 = vadd.f32 %v105, %v108
    %v111 = vld [vmem:[%s1] sm:$0x3]
    %vm112 = vcmp.gt.f32.partialorder %v111, 0.0
    %115 = vset.pattern.permute.xlu0 0
    %116 = vperm.xlu0 %115, %v109
    %v117 = vpop.permute.xlu0 %116
    %118 = vset.pattern.permute.xlu0 0
    %119 = vperm.xlu0 %118, %v110
    %v120 = vpop.permute.xlu0 %119
    %v121 = vlaneseq
    %v122 = vand.u32 %v121, 127
    %v123 = vlaneseq
    %v124 = vshrl.u32 %v123, 7
    %v125 = vsub.s32 %v122, %v124
    %v126 = vrot.slane %v117, %v125
    %v127 = vlaneseq
    %v128 = vshrl.u32 %v127, 7
    %v129 = vsub.s32 %v122, %v128
    %v130 = vrot.slane %v120, %v129
    %vm131 = vcmask 1041409
    %v132 = vsel %vm131, %v130, %v126
    %v134 = vsel %vm112, %v132, -inf
    %vm135 = vcmask 58368
    %v136 = vsel %vm135, %v134, -inf
    %137 = vmax.xlane.f32.xlu0 %v136
    %v138 = vpop.xlane.xlu0 %137
    %v139 = vsub.f32 %v134, %v138
    %v140 = vmul.f32 %v139, 1.442695
    %v141 = vpow.pop %v140
    %v142 = vsel %vm135, %v141, 0.0
    %143 = vadd.xlane.f32.xlu0 %v142
    %v144 = vpop.xlane.xlu0 %143
    %v145 = vrcp.pop %v144
    %v146 = vmul.f32 %v141, %v145
    %v149 = vunpack.c.l.s4 1966171168
    %v150 = vunpack.c.0.s8 %v149
    %v151 = vlaneseq
    %v152 = vshrl.u32 %v151, 7
    %v153 = vsub.s32 %v150, %v152
    %v154 = vrot.slane %v146, %v153
    %v155 = vcombine.high %v154, %v154
    %v157 = vunpack.c.l.s4 1966171168
    %v158 = vunpack.c.0.s8 %v157
    %v159 = vlaneseq
    %v160 = vshrl.u32 %v159, 7
    %v161 = vsub.s32 %v158, %v160
    %v162 = vrot.slane %v154, %v161
    %v164 = vunpack.c.l.s4 1966171168
    %v165 = vunpack.c.0.s8 %v164
    %v166 = vlaneseq
    %v167 = vshrl.u32 %v166, 7
    %v168 = vsub.s32 %v165, %v167
    %v169 = vrot.slane %v155, %v168
    %vm170 = vcmask 64512
    %v171 = vsel %vm170, %v162, 0
    %173 = vmatprep.subr.mxu0 0.0
    %174 = vmatpush1.msra.mxu0 %v19
    %175 = vmatprep.subr.mxu0 0.0
    %176 = vmatpush1.msra.mxu0 0.0
    %177 = vmatprep.subr.mxu0 0.0
    %178 = vmatpush1.msra.mxu0 0.0
    %179 = vmatprep.subr.mxu0 0.0
    %180 = vmatpush1.msra.mxu0 0.0
    %181 = vmatprep.subr.mxu0 0.0
    %182 = vmatpush1.msra.mxu0 0.0
    %183 = vmatprep.subr.mxu0 0.0
    %184 = vmatpush1.msra.mxu0 0.0
    %185 = vmatprep.subr.mxu0 0.0
    %186 = vmatpush1.msra.mxu0 0.0
    %187 = vmatprep.subr.mxu0 0.0
    %188 = vmatpush1.msra.mxu0 0.0
    %189 = vmatprep.subr.mxu0 0.0
    %190 = vmatpush1.msra.mxu0 0.0
    %191 = vmatprep.subr.mxu0 0.0
    %192 = vmatpush1.msra.mxu0 0.0
    %193 = vmatprep.subr.mxu0 0.0
    %194 = vmatpush1.msra.mxu0 0.0
    %195 = vmatprep.subr.mxu0 0.0
    %196 = vmatpush1.msra.mxu0 0.0
    %197 = vmatprep.subr.mxu0 0.0
    %198 = vmatpush1.msra.mxu0 0.0
    %199 = vmatprep.subr.mxu0 0.0
    %200 = vmatpush1.msra.mxu0 0.0
    %201 = vmatprep.subr.mxu0 0.0
    %202 = vmatpush1.msra.mxu0 0.0
    %203 = vmatprep.subr.mxu0 0.0
    %204 = vmatpush1.msra.mxu0 0.0
    %205 = vmatprep.subr.mxu0 0.0
    %206 = vmatpush1.msra.mxu0 0.0
    %207 = vmatprep.subr.mxu0 0.0
    %208 = vmatpush1.msra.mxu0 0.0
    %209 = vmatprep.subr.mxu0 0.0
    %210 = vmatpush1.msra.mxu0 0.0
    %211 = vmatprep.subr.mxu0 0.0
    %212 = vmatpush1.msra.mxu0 0.0
    %213 = vmatprep.subr.mxu0 0.0
    %214 = vmatpush1.msra.mxu0 0.0
    %215 = vmatprep.subr.mxu0 0.0
    %216 = vmatpush1.msra.mxu0 0.0
    %217 = vmatprep.subr.mxu0 0.0
    %218 = vmatpush1.msra.mxu0 0.0
    %219 = vmatprep.subr.mxu0 0.0
    %220 = vmatpush1.msra.mxu0 0.0
    %221 = vmatprep.subr.mxu0 0.0
    %222 = vmatpush1.msra.mxu0 0.0
    %223 = vmatprep.subr.mxu0 0.0
    %224 = vmatpush1.msra.mxu0 0.0
    %225 = vmatprep.subr.mxu0 0.0
    %226 = vmatpush1.msra.mxu0 0.0
    %227 = vmatprep.subr.mxu0 0.0
    %228 = vmatpush1.msra.mxu0 0.0
    %229 = vmatprep.subr.mxu0 0.0
    %230 = vmatpush1.msra.mxu0 0.0
    %231 = vmatprep.subr.mxu0 0.0
    %232 = vmatpush1.msra.mxu0 0.0
    %233 = vmatprep.subr.mxu0 0.0
    %234 = vmatpush1.msra.mxu0 0.0
    %235 = vmatprep.subr.mxu0 0.0
    %236 = vmatpush1.msra.mxu0 0.0
    %237 = vmatprep.mubr.f32.mxu0 0.0
    %238 = vmatmul.mubr.f32.gmra.mrb[0].mxu0 %v171
    %v239 = vpop.f32.mrb[0].mxu0
    %v240 = vadd.f32 0.0, %v239
    %v241 = vpop.f32.mrb[0].mxu0
    %242 = vdwg.mxu0
    %v243 = vsel %vm170, %v169, 0
    %245 = vmatprep.subr.mxu0 0.0
    %246 = vmatpush1.msra.mxu0 %v20
    %247 = vmatprep.subr.mxu0 0.0
    %248 = vmatpush1.msra.mxu0 0.0
    %249 = vmatprep.subr.mxu0 0.0
    %250 = vmatpush1.msra.mxu0 0.0
    %251 = vmatprep.subr.mxu0 0.0
    %252 = vmatpush1.msra.mxu0 0.0
    %253 = vmatprep.subr.mxu0 0.0
    %254 = vmatpush1.msra.mxu0 0.0
    %255 = vmatprep.subr.mxu0 0.0
    %256 = vmatpush1.msra.mxu0 0.0
    %257 = vmatprep.subr.mxu0 0.0
    %258 = vmatpush1.msra.mxu0 0.0
    %259 = vmatprep.subr.mxu0 0.0
    %260 = vmatpush1.msra.mxu0 0.0
    %261 = vmatprep.subr.mxu0 0.0
    %262 = vmatpush1.msra.mxu0 0.0
    %263 = vmatprep.subr.mxu0 0.0
    %264 = vmatpush1.msra.mxu0 0.0
    %265 = vmatprep.subr.mxu0 0.0
    %266 = vmatpush1.msra.mxu0 0.0
    %267 = vmatprep.subr.mxu0 0.0
    %268 = vmatpush1.msra.mxu0 0.0
    %269 = vmatprep.subr.mxu0 0.0
    %270 = vmatpush1.msra.mxu0 0.0
    %271 = vmatprep.subr.mxu0 0.0
    %272 = vmatpush1.msra.mxu0 0.0
    %273 = vmatprep.subr.mxu0 0.0
    %274 = vmatpush1.msra.mxu0 0.0
    %275 = vmatprep.subr.mxu0 0.0
    %276 = vmatpush1.msra.mxu0 0.0
    %277 = vmatprep.subr.mxu0 0.0
    %278 = vmatpush1.msra.mxu0 0.0
    %279 = vmatprep.subr.mxu0 0.0
    %280 = vmatpush1.msra.mxu0 0.0
    %281 = vmatprep.subr.mxu0 0.0
    %282 = vmatpush1.msra.mxu0 0.0
    %283 = vmatprep.subr.mxu0 0.0
    %284 = vmatpush1.msra.mxu0 0.0
    %285 = vmatprep.subr.mxu0 0.0
    %286 = vmatpush1.msra.mxu0 0.0
    %287 = vmatprep.subr.mxu0 0.0
    %288 = vmatpush1.msra.mxu0 0.0
    %289 = vmatprep.subr.mxu0 0.0
    %290 = vmatpush1.msra.mxu0 0.0
    %291 = vmatprep.subr.mxu0 0.0
    %292 = vmatpush1.msra.mxu0 0.0
    %293 = vmatprep.subr.mxu0 0.0
    %294 = vmatpush1.msra.mxu0 0.0
    %295 = vmatprep.subr.mxu0 0.0
    %296 = vmatpush1.msra.mxu0 0.0
    %297 = vmatprep.subr.mxu0 0.0
    %298 = vmatpush1.msra.mxu0 0.0
    %299 = vmatprep.subr.mxu0 0.0
    %300 = vmatpush1.msra.mxu0 0.0
    %301 = vmatprep.subr.mxu0 0.0
    %302 = vmatpush1.msra.mxu0 0.0
    %303 = vmatprep.subr.mxu0 0.0
    %304 = vmatpush1.msra.mxu0 0.0
    %305 = vmatprep.subr.mxu0 0.0
    %306 = vmatpush1.msra.mxu0 0.0
    %307 = vmatprep.subr.mxu0 0.0
    %308 = vmatpush1.msra.mxu0 0.0
    %309 = vmatprep.mubr.f32.mxu0 0.0
    %310 = vmatmul.mubr.f32.gmra.mrb[0].mxu0 %v243
    %v311 = vpop.f32.mrb[0].mxu0
    %v312 = vadd.f32 0.0, %v311
    %v313 = vpop.f32.mrb[0].mxu0
    %314 = vdwg.mxu0
    %v317 = vrot.slane %v312, 7
    %v318 = vsel %vm131, %v317, %v240
    %vm320 = vcmask 254976
    %321 = vst.msk [vmem:[#allocation3] sm:$0x3] %vm320, %v318
    // Predicated region
    $region18: #{tpu_custom_call.1} parent=1 // pred_check
      _
    $region19: #{tpu_custom_call.1} parent=1 // pred_check_branch
      %323 = sbr.rel (0) target = $region21
    $region20: #{tpu_custom_call.1} parent=1 // pred_region
      %s325 = ssub.s32 32, 32
      %326 = vsyncadd [#allocation4], %s325
      %s328 = sshll.u32 [#allocation3], 4
      %s329 = int_to_ptr.vmem [resolvable:$true] %s328
      %331 = dma.vmem_to_hbm [thread:$0]  %s329, 32, %s4, [#allocation4]
    $region21: #{tpu_custom_call.1} parent=1 // pred_fallthru
      _
    // Predicated region
    $region22: #{tpu_custom_call.1} parent=1 // pred_check
      _
    $region23: #{tpu_custom_call.1} parent=1 // pred_check_branch
      %333 = sbr.rel (0) target = $region25
    $region24: #{tpu_custom_call.1} parent=1 // pred_region
      %334 = dma.done [#allocation4], 32
    $region25: #{tpu_custom_call.1} parent=1 // pred_fallthru
      _
    %335 = vsyncpa [#allocation4], 1

</llo_original>
